<compile_context>
chip_gen: v5e
topology: v5e:2x2
jax: 0.10.0
libtpu: 0.0.40
codegen_flags: <defaults>
</compile_context>

<pallas_src>
import functools
import math

import jax
import jax.numpy as jnp
from jax.experimental import pallas as pl
from jax.experimental.pallas import tpu as pltpu


def _pairwise_kernel_body(xi_ref, xj_ref, o_ref, acc_ref, *,
                          sigma, kerneltype, feat_dim):
    """One (TM, TN) output tile, accumulated over K-tiles of the feature axis.

    xi_ref:  (TM, TK)  row block of x
    xj_ref:  (TN, TK)  column block of x
    o_ref:   (TM, TN)  output tile (written on the last K step)
    acc_ref: (TM, TN)  f32 squared-distance accumulator (VMEM scratch)
    """
    k = pl.program_id(2)

    @pl.when(k == 0)
    def _init():
        acc_ref[...] = jnp.zeros_like(acc_ref)

    xi = xi_ref[...].astype(jnp.float32)          # (TM, TK)
    xj = xj_ref[...].astype(jnp.float32)          # (TN, TK)

    # MXU: cross term  xi @ xj^T
    cross = jnp.dot(xi, xj.T, preferred_element_type=jnp.float32)   # (TM, TN)
    # VPU reductions: per-row squared norms of this K-slice.
    ni = jnp.sum(xi * xi, axis=1, keepdims=True)                    # (TM, 1)
    nj = jnp.sum(xj * xj, axis=1, keepdims=True)                    # (TN, 1)

    # Partial squared distance for this K-slice; sums to the full distance.
    acc_ref[...] += (ni - 2.0 * cross) + nj.T

    @pl.when(k == pl.num_programs(2) - 1)
    def _finalize():
        # Clamp tiny negatives from cancellation (near-duplicate rows / diagonal).
        sq = jnp.maximum(acc_ref[...], 0.0)
        if kerneltype == "rbf":
            o_ref[...] = jnp.exp((-0.5 / (sigma * sigma)) * sq)
        else:  # "student"
            mean_sq = sq * (1.0 / float(feat_dim))
            o_ref[...] = sigma * pl.reciprocal(sigma + mean_sq, approx=True)


def compute_kernel(x, sigma, kerneltype, *, tm=256, tn=256, tk=512):
    """JAX/Pallas equivalent of compute_kernel.forward(x, sigma, kerneltype)."""
    if kerneltype not in ("rbf", "student"):
        raise ValueError(f"unknown kerneltype: {kerneltype}")

    x = jnp.asarray(x)
    if x.ndim == 1:
        # TODO(synk): torch's `mean(..., axis=())` semantics for 1-D 'student' are
        # version-dependent; here it is treated as a D=1 feature reduction
        # (the 1-D 'rbf' branch is matched exactly).
        x2d = x.reshape(-1, 1)
    else:
        x2d = x.reshape(x.shape[0], -1)

    n, d = x2d.shape

    def _round_up(v, m):
        return ((v + m - 1) // m) * m

    # Lane-dense, (8,128)-aligned MXU-shaped tiles; shrink for small problems.
    tm = min(tm, _round_up(n, 128))
    tn = min(tn, _round_up(n, 128))
    tk = min(tk, _round_up(d, 128))
    n_pad = _round_up(n, math.lcm(tm, tn))
    d_pad = _round_up(d, tk)

    if (n_pad, d_pad) != (n, d):
        # Zero padding on D leaves squared distances unchanged; padded rows/cols
        # of the output are sliced off below.
        x2d = jnp.pad(x2d, ((0, n_pad - n), (0, d_pad - d)))
    x2d = x2d.astype(jnp.float32)

    kernel_fn = functools.partial(
        _pairwise_kernel_body,
        sigma=float(sigma),
        kerneltype=kerneltype,
        feat_dim=d,
    )

    grid = (n_pad // tm, n_pad // tn, d_pad // tk)

    out = pl.pallas_call(
        kernel_fn,
        out_shape=jax.ShapeDtypeStruct((n_pad, n_pad), jnp.float32),
        grid_spec=pltpu.PrefetchScalarGridSpec(
            num_scalar_prefetch=0,
            grid=grid,
            in_specs=[
                pl.BlockSpec((tm, tk), lambda i, j, k: (i, k)),   # row block
                pl.BlockSpec((tn, tk), lambda i, j, k: (j, k)),   # column block
            ],
            out_specs=pl.BlockSpec((tm, tn), lambda i, j, k: (i, j)),
            scratch_shapes=[pltpu.VMEM((tm, tn), jnp.float32)],
        ),
        compiler_params=pltpu.CompilerParams(
            dimension_semantics=("parallel", "parallel", "arbitrary"),
        ),
    )(x2d, x2d)

    # TODO(synk): exploit symmetry K[i,j] == K[j,i] (compute j >= i blocks only and
    # mirror in the wrapper) for a further ~2x on large N.
    return out[:n, :n]


def _reference(x, sigma, kerneltype):
    """Pure-JAX reference mirroring the torch module."""
    x = jnp.asarray(x)
    x2d = x.reshape(x.shape[0], -1) if x.ndim > 1 else x.reshape(-1, 1)
    x1 = x2d[None, :, :]
    x2 = x2d[:, None, :]
    if kerneltype == "rbf":
        return jnp.exp(-0.5 * jnp.sum((x1 - x2) ** 2, axis=-1) / sigma**2)
    else:
        return 1.0 / (sigma + jnp.mean((x1 - x2) ** 2, axis=-1)) * sigma


if __name__ == "__main__":
    key = jax.random.PRNGKey(0)
    # Small deterministic example: N=16 samples, each a (4, 16, 16) feature map
    # (flattened feature dim D = 1024).
    x = jax.random.normal(key, (16, 4, 16, 16), dtype=jnp.float32)
    sigma = 32.0   # keeps the rbf values away from underflow for this D

    k_rbf = compute_kernel(x, sigma, "rbf")
    k_stu = compute_kernel(x, sigma, "student")

    # 1-D input path (rbf), matches torch's 1-D branch exactly.
    x1d = jax.random.normal(jax.random.PRNGKey(0), (16,), dtype=jnp.float32)
    k_rbf_1d = compute_kernel(x1d, 1.5, "rbf")

    jax.block_until_ready((k_rbf, k_stu, k_rbf_1d))

    assert k_rbf.shape == (16, 16) and k_stu.shape == (16, 16)
    assert k_rbf_1d.shape == (16, 16)
    assert jnp.allclose(k_rbf, _reference(x, sigma, "rbf"), rtol=1e-4, atol=1e-5)
    # student uses the EUP approximate reciprocal -> slightly looser tolerance.
    assert jnp.allclose(k_stu, _reference(x, sigma, "student"), rtol=2e-3, atol=2e-3)
    assert jnp.allclose(k_rbf_1d, _reference(x1d, 1.5, "rbf"), rtol=1e-4, atol=1e-5)

    print("KERNEL_OK")
</pallas_src>

<mosaic_0001>
module attributes {stable_mosaic.version = 11 : i64} {
  func.func @_pairwise_kernel_body(%arg0: i32, %arg1: i32, %arg2: i32, %arg3: memref<128x512xf32, #tpu.memory_space<vmem>>, %arg4: memref<128x512xf32, #tpu.memory_space<vmem>>, %arg5: memref<128x128xf32, #tpu.memory_space<vmem>>, %arg6: memref<128x128xf32, #tpu.memory_space<vmem>>) attributes {dimension_semantics = [#tpu.dimension_semantics<parallel>, #tpu.dimension_semantics<parallel>, #tpu.dimension_semantics<arbitrary>], iteration_bounds = array<i64: 1, 1, 2>, scalar_prefetch = 0 : i64, scratch_operands = 1 : i64, tpu.core_type = #tpu.core_type<tc>, window_params = [{transform_indices = @transform_0, window_bounds = array<i64: 128, 512>}, {transform_indices = @transform_1, window_bounds = array<i64: 128, 512>}, {transform_indices = @transform_2, window_bounds = array<i64: 128, 128>}]} {
    %c0_i32 = arith.constant 0 : i32
    %0 = arith.cmpi eq, %arg2, %c0_i32 : i32
    %1 = arith.extui %0 : i1 to i32
    %c0_i32_0 = arith.constant 0 : i32
    %2 = arith.cmpi ne, %1, %c0_i32_0 : i32
    scf.if %2 {
      %cst_12 = arith.constant 0.000000e+00 : f32
      %26 = vector.broadcast %cst_12 : f32 to vector<128x128xf32>
      %c0_13 = arith.constant 0 : index
      %c0_14 = arith.constant 0 : index
      %27 = vector.load %arg6[%c0_13, %c0_14] : memref<128x128xf32, #tpu.memory_space<vmem>>, vector<128x128xf32>
      tpu.vector_store %arg6[%c0_13, %c0_14], %26 {strides = array<i32>} : memref<128x128xf32, #tpu.memory_space<vmem>>, vector<128x128xf32>,
    } else {
    }
    %c0 = arith.constant 0 : index
    %c0_1 = arith.constant 0 : index
    %3 = vector.load %arg3[%c0, %c0_1] : memref<128x512xf32, #tpu.memory_space<vmem>>, vector<128x512xf32>
    %c0_2 = arith.constant 0 : index
    %c0_3 = arith.constant 0 : index
    %4 = vector.load %arg4[%c0_2, %c0_3] : memref<128x512xf32, #tpu.memory_space<vmem>>, vector<128x512xf32>
    %5 = tpu.transpose %4, [1, 0] : vector<128x512xf32> -> vector<512x128xf32>
    %cst = arith.constant dense<0.000000e+00> : vector<128x128xf32>
    %6 = tpu.matmul %3, %5, %cst {dimension_numbers = #tpu.dot_dimension_numbers<[1], [0], [0], [1], [0, 0, 1, 1], [], []>} : vector<128x512xf32>, vector<512x128xf32>, vector<128x128xf32> -> vector<128x128xf32>
    %7 = arith.mulf %3, %3 : vector<128x512xf32>
    %cst_4 = arith.constant dense<0.000000e+00> : vector<128xf32>
    %8 = vector.multi_reduction <add>, %7, %cst_4 [1] : vector<128x512xf32> to vector<128xf32>
    %9 = vector.shape_cast %8 : vector<128xf32> to vector<128x1xf32>
    %10 = arith.mulf %4, %4 : vector<128x512xf32>
    %cst_5 = arith.constant dense<0.000000e+00> : vector<128xf32>
    %11 = vector.multi_reduction <add>, %10, %cst_5 [1] : vector<128x512xf32> to vector<128xf32>
    %12 = vector.shape_cast %11 : vector<128xf32> to vector<128x1xf32>
    %c0_6 = arith.constant 0 : index
    %c0_7 = arith.constant 0 : index
    %13 = vector.load %arg6[%c0_6, %c0_7] : memref<128x128xf32, #tpu.memory_space<vmem>>, vector<128x128xf32>
    %cst_8 = arith.constant 2.000000e+00 : f32
    %14 = vector.broadcast %cst_8 : f32 to vector<128x128xf32>
    %15 = arith.mulf %14, %6 : vector<128x128xf32>
    %16 = vector.broadcast %9 : vector<128x1xf32> to vector<128x128xf32>
    %17 = arith.subf %16, %15 : vector<128x128xf32>
    %18 = tpu.transpose %12, [1, 0] : vector<128x1xf32> -> vector<1x128xf32>
    %19 = vector.broadcast %18 : vector<1x128xf32> to vector<128x128xf32>
    %20 = arith.addf %17, %19 : vector<128x128xf32>
    %21 = arith.addf %13, %20 : vector<128x128xf32>
    %c0_9 = arith.constant 0 : index
    %c0_10 = arith.constant 0 : index
    %22 = vector.load %arg6[%c0_9, %c0_10] : memref<128x128xf32, #tpu.memory_space<vmem>>, vector<128x128xf32>
    tpu.vector_store %arg6[%c0_9, %c0_10], %21 {strides = array<i32>} : memref<128x128xf32, #tpu.memory_space<vmem>>, vector<128x128xf32>,
    %c1_i32 = arith.constant 1 : i32
    %23 = arith.cmpi eq, %arg2, %c1_i32 : i32
    %24 = arith.extui %23 : i1 to i32
    %c0_i32_11 = arith.constant 0 : i32
    %25 = arith.cmpi ne, %24, %c0_i32_11 : i32
    scf.if %25 {
      %c0_12 = arith.constant 0 : index
      %c0_13 = arith.constant 0 : index
      %26 = vector.load %arg6[%c0_12, %c0_13] : memref<128x128xf32, #tpu.memory_space<vmem>>, vector<128x128xf32>
      %cst_14 = arith.constant 0.000000e+00 : f32
      %27 = vector.broadcast %cst_14 : f32 to vector<128x128xf32>
      %28 = arith.maximumf %26, %27 : vector<128x128xf32>
      %cst_15 = arith.constant -4.8828125E-4 : f32
      %29 = vector.broadcast %cst_15 : f32 to vector<128x128xf32>
      %30 = arith.mulf %29, %28 : vector<128x128xf32>
      %31 = math.exp %30 : vector<128x128xf32>
      %c0_16 = arith.constant 0 : index
      %c0_17 = arith.constant 0 : index
      %32 = vector.load %arg5[%c0_16, %c0_17] : memref<128x128xf32, #tpu.memory_space<vmem>>, vector<128x128xf32>
      tpu.vector_store %arg5[%c0_16, %c0_17], %31 {strides = array<i32>} : memref<128x128xf32, #tpu.memory_space<vmem>>, vector<128x128xf32>,
    } else {
    }
    return
  }
  func.func @transform_0(%arg0: i32, %arg1: i32, %arg2: i32) -> (i32, i32) {
    %c0_i32 = arith.constant 0 : i32
    return %arg0, %arg2 : i32, i32
  }
  func.func @transform_1(%arg0: i32, %arg1: i32, %arg2: i32) -> (i32, i32) {
    %c0_i32 = arith.constant 0 : i32
    return %arg1, %arg2 : i32, i32
  }
  func.func @transform_2(%arg0: i32, %arg1: i32, %arg2: i32) -> (i32, i32) {
    %c0_i32 = arith.constant 0 : i32
    return %arg0, %arg1 : i32, i32
  }
}

</mosaic_0001>

<llo_original>
// kernel: tpu_custom_call.1
$region0: #{tpu_custom_call.1}
  #allocation0 [shape = 'u32[]', space=smem, size = 0x4, offset = 0x4, fixed_abs, tag = 'smem constant byte address 0x4 - core index']
  #allocation1 [shape = 'u32[72,128]{1,0:T(1,128)}', space=vmem, size = 0x9000, scoped, tag = 'internal scratch']
  #allocation2 [shape = 'f32[128,128]{1,0:T(8,128)}', space=vmem, size = 0x10000, scoped, tag = 'scratch operand']
  %s0 = inlined_call_operand.hbm [shape: f32[128,1024], index: 0, kind: input, shape index: {}]
  %s1 = inlined_call_operand.hbm [shape: f32[128,1024], index: 1, kind: input, shape index: {}]
  %s2 = inlined_call_operand.hbm [shape: f32[128,128], index: 2, kind: output, shape index: {}]
  %s3 = sld [smem:[#allocation0]]
  $region57: #{tpu_custom_call.1} parent=0
    _
  %s5 = ssub.s32 1, %s3
  %s6 = scalar_select 0, %s5, %s3
  $region1: #{tpu_custom_call.1} parent=0
    #allocation3 [shape = 'u8[524288]{0}', space=vmem, size = 0x80000, scoped, tag = 'input window, operand 0']
    #allocation4 [shape = 's32[2]{0}', space=sflag, size = 0x8, scoped, tag = 'scoped memory for tpu_custom_call.1']
    #allocation5 [shape = 's32[2]{0}', space=sflag, size = 0x8, scoped, tag = 'scoped memory for tpu_custom_call.1']
    #allocation6 [shape = 'u8[524288]{0}', space=vmem, size = 0x80000, scoped, tag = 'input window, operand 1']
    #allocation7 [shape = 's32[2]{0}', space=sflag, size = 0x8, scoped, tag = 'scoped memory for tpu_custom_call.1']
    #allocation8 [shape = 'u8[65536]{0}', space=vmem, size = 0x10000, scoped, tag = 'output window, operand 0, single buffered']
    %7 = vsyncpa [#allocation4], 0
    %s8 = scalar_lea.sflag [#allocation4], 1
    %9 = vsyncpa %s8, 0
    %10 = vsyncpa [#allocation7], 0
    %s11 = scalar_lea.sflag [#allocation7], 1
    %12 = vsyncpa %s11, 0
    %13 = vsyncpa [#allocation5], 0
    loop: start=0, step=1, limit=4
    $region2: #{tpu_custom_call.1} parent=1 // loop_pre_header
      _
    $region3: #{tpu_custom_call.1} parent=1 // loop_header
      %s15 = sphi 0, %s19
      %p16 = scmp.ge.s32.totalorder %s15, 4
      %s22 = sphi 0, %s41
      %s23 = sphi 0, %s37
      %s24 = sphi 0, %s33
      %s25 = sphi 0, %s22
      %s26 = sphi 0, %s23
      %s27 = sphi 0, %s24
      %s28 = sphi 0, %s25
      %s29 = sphi 0, %s26
      %s30 = sphi 0, %s27
      %s46 = sphi 0, %s48
      %s49 = sphi 0, %s46
      %s50 = sphi 0, %s49
      %s66 = sphi 0, %s50
      %s74 = sphi 0, %s76
      %s77 = sphi 0, %s74
      %s78 = sphi 0, %s77
      %s94 = sphi 0, %s78
      %s102 = sphi 0, %s104
      %s105 = sphi 0, %s102
      %s106 = sphi 0, %s105
      %s122 = sphi 0, %s106
    $region4: #{tpu_custom_call.1} parent=1 // loop_header_branch
      %18 = sbr.rel (%p16) target = $region8
    $region5: #{tpu_custom_call.1} parent=1 // loop_body
      %s20 = ssub.s32 %s15, 1
      %s21 = ssub.s32 %s15, 2
      %s31 = sadd.s32 1, %s24
      %p32 = scmp.ge.s32.totalorder %s31, 2
      %s33 = scalar_select %p32, 0, %s31
      %s34 = sadd.s32 1, %s23
      %s35 = scalar_select %p32, %s34, %s23
      %p36 = scmp.ge.s32.totalorder %s35, 1
      %s37 = scalar_select %p36, 0, %s35
      %s38 = sadd.s32 1, %s22
      %s39 = scalar_select %p36, %s38, %s22
      %p40 = scmp.ge.s32.totalorder %s39, 1
      %s41 = scalar_select %p40, 0, %s39
      %s42 = ssub.s32 %s22, %s41
      %s43 = ssub.s32 %s24, %s33
      %s44 = sor.u32 %s42, %s43
      %p45 = scmp.eq.s32.totalorder %s44, 0
      %s47 = sadd.s32 %s46, 1
      %s48 = scalar_select %p45, %s46, %s47
      %p51 = pneg %p45
      %p52 = scmp.eq.s32.totalorder %s15, 1
      %p53 = por %p51, %p52
      %p54 = scmp.ne.s32.totalorder %s46, %s49
      %p55 = scmp.eq.s32.totalorder %s15, 0
      %p56 = por %p54, %p55
      %p57 = scmp.ne.s32.totalorder %s46, %s49
      %p58 = scmp.eq.s32.totalorder %s20, 1
      %p59 = por %p57, %p58
      %p60 = scmp.ne.s32.totalorder %s49, %s50
      %p61 = scmp.eq.s32.totalorder %s20, 0
      %p62 = por %p60, %p61
      %p63 = scmp.ne.s32.totalorder %s49, %s50
      %p64 = scmp.eq.s32.totalorder %s21, 1
      %p65 = por %p63, %p64
      %p67 = scmp.ne.s32.totalorder %s50, %s66
      %p68 = scmp.eq.s32.totalorder %s21, 0
      %p69 = por %p67, %p68
      %s70 = ssub.s32 %s23, %s37
      %s71 = ssub.s32 %s24, %s33
      %s72 = sor.u32 %s70, %s71
      %p73 = scmp.eq.s32.totalorder %s72, 0
      %s75 = sadd.s32 %s74, 1
      %s76 = scalar_select %p73, %s74, %s75
      %p79 = pneg %p73
      %p80 = scmp.eq.s32.totalorder %s15, 1
      %p81 = por %p79, %p80
      %p82 = scmp.ne.s32.totalorder %s74, %s77
      %p83 = scmp.eq.s32.totalorder %s15, 0
      %p84 = por %p82, %p83
      %p85 = scmp.ne.s32.totalorder %s74, %s77
      %p86 = scmp.eq.s32.totalorder %s20, 1
      %p87 = por %p85, %p86
      %p88 = scmp.ne.s32.totalorder %s77, %s78
      %p89 = scmp.eq.s32.totalorder %s20, 0
      %p90 = por %p88, %p89
      %p91 = scmp.ne.s32.totalorder %s77, %s78
      %p92 = scmp.eq.s32.totalorder %s21, 1
      %p93 = por %p91, %p92
      %p95 = scmp.ne.s32.totalorder %s78, %s94
      %p96 = scmp.eq.s32.totalorder %s21, 0
      %p97 = por %p95, %p96
      %s98 = ssub.s32 %s22, %s41
      %s99 = ssub.s32 %s23, %s37
      %s100 = sor.u32 %s98, %s99
      %p101 = scmp.eq.s32.totalorder %s100, 0
      %s103 = sadd.s32 %s102, 1
      %s104 = scalar_select %p101, %s102, %s103
      %p107 = pneg %p101
      %p108 = scmp.eq.s32.totalorder %s15, 1
      %p109 = por %p107, %p108
      %p110 = scmp.ne.s32.totalorder %s102, %s105
      %p111 = scmp.eq.s32.totalorder %s15, 0
      %p112 = por %p110, %p111
      %p113 = scmp.ne.s32.totalorder %s102, %s105
      %p114 = scmp.eq.s32.totalorder %s20, 1
      %p115 = por %p113, %p114
      %p116 = scmp.ne.s32.totalorder %s105, %s106
      %p117 = scmp.eq.s32.totalorder %s20, 0
      %p118 = por %p116, %p117
      %p119 = scmp.ne.s32.totalorder %s105, %s106
      %p120 = scmp.eq.s32.totalorder %s21, 1
      %p121 = por %p119, %p120
      %p123 = scmp.ne.s32.totalorder %s106, %s122
      %p124 = scmp.eq.s32.totalorder %s21, 0
      %p125 = por %p123, %p124
      %p126 = scmp.le.s32.totalorder 1, %s15
      %p127 = scmp.lt.s32.totalorder %s15, 3
      %p128 = pnand %p126, %p127
      %p129 = pneg %p128
      // Predicated region
      $region9: #{tpu_custom_call.1} parent=5 // pred_check
        _
      $region10: #{tpu_custom_call.1} parent=5 // pred_check_branch
        %131 = sbr.rel (%p128) target = $region12
      $region11: #{tpu_custom_call.1} parent=5 // pred_region
        %s132 = ssub.s32 %s15, 1
      $region12: #{tpu_custom_call.1} parent=5 // pred_fallthru
        _
      %p133 = scmp.lt.s32.totalorder %s15, 2
      // Predicated region
      $region13: #{tpu_custom_call.1} parent=5 // pred_check
        %p134 = pneg %p133
      $region14: #{tpu_custom_call.1} parent=5 // pred_check_branch
        %136 = sbr.rel (%p134) target = $region16
      $region15: #{tpu_custom_call.1} parent=5 // pred_region
        // Predicated region
        $region17: #{tpu_custom_call.1} parent=15 // pred_check
          %p137 = pneg %p56
        $region18: #{tpu_custom_call.1} parent=15 // pred_check_branch
          %139 = sbr.rel (%p137) target = $region20
        $region19: #{tpu_custom_call.1} parent=15 // pred_region
          %s140 = sand.u32 %s46, 1
          %s141 = scalar_lea.sflag [#allocation4], %s140
          %s142 = sand.u32 %s46, 1
          %s143 = smul.addr %s142, 512
          %s144 = scalar_lea.vmem [#allocation3], %s143
          %s145 = smul.u32 16, %s22
          %s146 = smul.u32 4, %s24
          %148 = vsyncadd %s141, 0
          %s149 = smul.addr %s145, 8
          %s150 = sadd.s32 %s146, %s149
          %s151 = smul.addr %s150, 8
          %s152 = scalar_lea.hbm %s0, %s151
          %s153 = sshll.u32 %s152, 4
          %s154 = int_to_ptr.hbm [resolvable:$true] %s153
          %s155 = sshll.u32 %s144, 4
          %s156 = int_to_ptr.vmem [resolvable:$true] %s155
          %161 = dma.hbm_to_vmem [thread:$0]  %s154, 8192, %s156, %s141, 1024, 512, 32
        $region20: #{tpu_custom_call.1} parent=15 // pred_fallthru
          _
        // Predicated region
        $region21: #{tpu_custom_call.1} parent=15 // pred_check
          %p162 = pneg %p84
        $region22: #{tpu_custom_call.1} parent=15 // pred_check_branch
          %164 = sbr.rel (%p162) target = $region24
        $region23: #{tpu_custom_call.1} parent=15 // pred_region
          %s165 = sand.u32 %s74, 1
          %s166 = scalar_lea.sflag [#allocation7], %s165
          %s167 = sand.u32 %s74, 1
          %s168 = smul.addr %s167, 512
          %s169 = scalar_lea.vmem [#allocation6], %s168
          %s170 = smul.u32 16, %s23
          %s171 = smul.u32 4, %s24
          %173 = vsyncadd %s166, 0
          %s174 = smul.addr %s170, 8
          %s175 = sadd.s32 %s171, %s174
          %s176 = smul.addr %s175, 8
          %s177 = scalar_lea.hbm %s1, %s176
          %s178 = sshll.u32 %s177, 4
          %s179 = int_to_ptr.hbm [resolvable:$true] %s178
          %s180 = sshll.u32 %s169, 4
          %s181 = int_to_ptr.vmem [resolvable:$true] %s180
          %186 = dma.hbm_to_vmem [thread:$0]  %s179, 8192, %s181, %s166, 1024, 512, 32
        $region24: #{tpu_custom_call.1} parent=15 // pred_fallthru
          _
      $region16: #{tpu_custom_call.1} parent=5 // pred_fallthru
        _
      %p187 = scmp.le.s32.totalorder 1, %s15
      %p188 = scmp.lt.s32.totalorder %s15, 3
      %p189 = pnand %p187, %p188
      %p190 = pneg %p189
      // Predicated region
      $region25: #{tpu_custom_call.1} parent=5 // pred_check
        _
      $region26: #{tpu_custom_call.1} parent=5 // pred_check_branch
        %192 = sbr.rel (%p189) target = $region28
      $region27: #{tpu_custom_call.1} parent=5 // pred_region
        %s193 = ssub.s32 %s15, 1
        %s194 = sand.u32 %s49, 1
        %s195 = scalar_lea.sflag [#allocation4], %s194
        %s196 = sand.u32 %s49, 1
        %s197 = smul.addr %s196, 512
        %s198 = scalar_lea.vmem [#allocation3], %s197
        // Predicated region
        $region29: #{tpu_custom_call.1} parent=27 // pred_check
          %p199 = pneg %p62
        $region30: #{tpu_custom_call.1} parent=27 // pred_check_branch
          %201 = sbr.rel (%p199) target = $region32
        $region31: #{tpu_custom_call.1} parent=27 // pred_region
          %203 = dma.done %s195, 8192
        $region32: #{tpu_custom_call.1} parent=27 // pred_fallthru
          _
        %s204 = sand.u32 %s77, 1
        %s205 = scalar_lea.sflag [#allocation7], %s204
        %s206 = sand.u32 %s77, 1
        %s207 = smul.addr %s206, 512
        %s208 = scalar_lea.vmem [#allocation6], %s207
        // Predicated region
        $region33: #{tpu_custom_call.1} parent=27 // pred_check
          %p209 = pneg %p90
        $region34: #{tpu_custom_call.1} parent=27 // pred_check_branch
          %211 = sbr.rel (%p209) target = $region36
        $region35: #{tpu_custom_call.1} parent=27 // pred_region
          %213 = dma.done %s205, 8192
        $region36: #{tpu_custom_call.1} parent=27 // pred_fallthru
          _
        %s214 = sand.u32 %s49, 1
        %s215 = scalar_lea.sflag [#allocation4], %s214
        %s216 = sand.u32 %s49, 1
        %s217 = smul.addr %s216, 512
        %s218 = scalar_lea.vmem [#allocation3], %s217
        %p219 = pneg %p62
        %p220 = pneg %p59
        %s221 = sand.u32 %s77, 1
        %s222 = scalar_lea.sflag [#allocation7], %s221
        %s223 = sand.u32 %s77, 1
        %s224 = smul.addr %s223, 512
        %s225 = scalar_lea.vmem [#allocation6], %s224
        %p226 = pneg %p90
        %p227 = pneg %p87
        %p228 = pneg %p118
        %p229 = pneg %p115
        %s230 = smul.u32 16, %s25
        %s231 = smul.u32 4, %s27
        %s232 = smul.u32 16, %s26
        %s233 = smul.u32 4, %s27
        %s234 = smul.u32 16, %s25
        %p235 = scmp.eq.s32.totalorder %s27, 0
        // Predicated region
        $region37: #{tpu_custom_call.1} parent=27 // pred_check
          %p236 = pneg %p235
        $region38: #{tpu_custom_call.1} parent=27 // pred_check_branch
          %238 = sbr.rel (%p236) target = $region40
        $region39: #{tpu_custom_call.1} parent=27 // pred_region
          %239 = vst [vmem:[#allocation2] sm:$0xff] 0.0
          %240 = vst [vmem:[#allocation2 + $0x8] sm:$0xff] 0.0
          %241 = vst [vmem:[#allocation2 + $0x10] sm:$0xff] 0.0
          %242 = vst [vmem:[#allocation2 + $0x18] sm:$0xff] 0.0
          %243 = vst [vmem:[#allocation2 + $0x20] sm:$0xff] 0.0
          %244 = vst [vmem:[#allocation2 + $0x28] sm:$0xff] 0.0
          %245 = vst [vmem:[#allocation2 + $0x30] sm:$0xff] 0.0
          %246 = vst [vmem:[#allocation2 + $0x38] sm:$0xff] 0.0
          %247 = vst [vmem:[#allocation2 + $0x40] sm:$0xff] 0.0
          %248 = vst [vmem:[#allocation2 + $0x48] sm:$0xff] 0.0
          %249 = vst [vmem:[#allocation2 + $0x50] sm:$0xff] 0.0
          %250 = vst [vmem:[#allocation2 + $0x58] sm:$0xff] 0.0
          %251 = vst [vmem:[#allocation2 + $0x60] sm:$0xff] 0.0
          %252 = vst [vmem:[#allocation2 + $0x68] sm:$0xff] 0.0
          %253 = vst [vmem:[#allocation2 + $0x70] sm:$0xff] 0.0
          %254 = vst [vmem:[#allocation2 + $0x78] sm:$0xff] 0.0
        $region40: #{tpu_custom_call.1} parent=27 // pred_fallthru
          _
        %v255 = vld [vmem:[%s198] sm:$0xff]
        %v256 = vld [vmem:[%s198 + $0x8] sm:$0xff]
        %v257 = vld [vmem:[%s198 + $0x10] sm:$0xff]
        %v258 = vld [vmem:[%s198 + $0x18] sm:$0xff]
        %v259 = vld [vmem:[%s198 + $0x20] sm:$0xff]
        %v260 = vld [vmem:[%s198 + $0x28] sm:$0xff]
        %v261 = vld [vmem:[%s198 + $0x30] sm:$0xff]
        %v262 = vld [vmem:[%s198 + $0x38] sm:$0xff]
        %v263 = vld [vmem:[%s198 + $0x40] sm:$0xff]
        %v264 = vld [vmem:[%s198 + $0x48] sm:$0xff]
        %v265 = vld [vmem:[%s198 + $0x50] sm:$0xff]
        %v266 = vld [vmem:[%s198 + $0x58] sm:$0xff]
        %v267 = vld [vmem:[%s198 + $0x60] sm:$0xff]
        %v268 = vld [vmem:[%s198 + $0x68] sm:$0xff]
        %v269 = vld [vmem:[%s198 + $0x70] sm:$0xff]
        %v270 = vld [vmem:[%s198 + $0x78] sm:$0xff]
        %v271 = vld [vmem:[%s198 + $0x80] sm:$0xff]
        %v272 = vld [vmem:[%s198 + $0x88] sm:$0xff]
        %v273 = vld [vmem:[%s198 + $0x90] sm:$0xff]
        %v274 = vld [vmem:[%s198 + $0x98] sm:$0xff]
        %v275 = vld [vmem:[%s198 + $0xa0] sm:$0xff]
        %v276 = vld [vmem:[%s198 + $0xa8] sm:$0xff]
        %v277 = vld [vmem:[%s198 + $0xb0] sm:$0xff]
        %v278 = vld [vmem:[%s198 + $0xb8] sm:$0xff]
        %v279 = vld [vmem:[%s198 + $0xc0] sm:$0xff]
        %v280 = vld [vmem:[%s198 + $0xc8] sm:$0xff]
        %v281 = vld [vmem:[%s198 + $0xd0] sm:$0xff]
        %v282 = vld [vmem:[%s198 + $0xd8] sm:$0xff]
        %v283 = vld [vmem:[%s198 + $0xe0] sm:$0xff]
        %v284 = vld [vmem:[%s198 + $0xe8] sm:$0xff]
        %v285 = vld [vmem:[%s198 + $0xf0] sm:$0xff]
        %v286 = vld [vmem:[%s198 + $0xf8] sm:$0xff]
        %v287 = vld [vmem:[%s198 + $0x100] sm:$0xff]
        %v288 = vld [vmem:[%s198 + $0x108] sm:$0xff]
        %v289 = vld [vmem:[%s198 + $0x110] sm:$0xff]
        %v290 = vld [vmem:[%s198 + $0x118] sm:$0xff]
        %v291 = vld [vmem:[%s198 + $0x120] sm:$0xff]
        %v292 = vld [vmem:[%s198 + $0x128] sm:$0xff]
        %v293 = vld [vmem:[%s198 + $0x130] sm:$0xff]
        %v294 = vld [vmem:[%s198 + $0x138] sm:$0xff]
        %v295 = vld [vmem:[%s198 + $0x140] sm:$0xff]
        %v296 = vld [vmem:[%s198 + $0x148] sm:$0xff]
        %v297 = vld [vmem:[%s198 + $0x150] sm:$0xff]
        %v298 = vld [vmem:[%s198 + $0x158] sm:$0xff]
        %v299 = vld [vmem:[%s198 + $0x160] sm:$0xff]
        %v300 = vld [vmem:[%s198 + $0x168] sm:$0xff]
        %v301 = vld [vmem:[%s198 + $0x170] sm:$0xff]
        %v302 = vld [vmem:[%s198 + $0x178] sm:$0xff]
        %v303 = vld [vmem:[%s198 + $0x180] sm:$0xff]
        %v304 = vld [vmem:[%s198 + $0x188] sm:$0xff]
        %v305 = vld [vmem:[%s198 + $0x190] sm:$0xff]
        %v306 = vld [vmem:[%s198 + $0x198] sm:$0xff]
        %v307 = vld [vmem:[%s198 + $0x1a0] sm:$0xff]
        %v308 = vld [vmem:[%s198 + $0x1a8] sm:$0xff]
        %v309 = vld [vmem:[%s198 + $0x1b0] sm:$0xff]
        %v310 = vld [vmem:[%s198 + $0x1b8] sm:$0xff]
        %v311 = vld [vmem:[%s198 + $0x1c0] sm:$0xff]
        %v312 = vld [vmem:[%s198 + $0x1c8] sm:$0xff]
        %v313 = vld [vmem:[%s198 + $0x1d0] sm:$0xff]
        %v314 = vld [vmem:[%s198 + $0x1d8] sm:$0xff]
        %v315 = vld [vmem:[%s198 + $0x1e0] sm:$0xff]
        %v316 = vld [vmem:[%s198 + $0x1e8] sm:$0xff]
        %v317 = vld [vmem:[%s198 + $0x1f0] sm:$0xff]
        %v318 = vld [vmem:[%s198 + $0x1f8] sm:$0xff]
        %v319 = vld [vmem:[%s208] sm:$0xff]
        %v320 = vld [vmem:[%s208 + $0x8] sm:$0xff]
        %v321 = vld [vmem:[%s208 + $0x10] sm:$0xff]
        %v322 = vld [vmem:[%s208 + $0x18] sm:$0xff]
        %v323 = vld [vmem:[%s208 + $0x20] sm:$0xff]
        %v324 = vld [vmem:[%s208 + $0x28] sm:$0xff]
        %v325 = vld [vmem:[%s208 + $0x30] sm:$0xff]
        %v326 = vld [vmem:[%s208 + $0x38] sm:$0xff]
        %v327 = vld [vmem:[%s208 + $0x40] sm:$0xff]
        %v328 = vld [vmem:[%s208 + $0x48] sm:$0xff]
        %v329 = vld [vmem:[%s208 + $0x50] sm:$0xff]
        %v330 = vld [vmem:[%s208 + $0x58] sm:$0xff]
        %v331 = vld [vmem:[%s208 + $0x60] sm:$0xff]
        %v332 = vld [vmem:[%s208 + $0x68] sm:$0xff]
        %v333 = vld [vmem:[%s208 + $0x70] sm:$0xff]
        %v334 = vld [vmem:[%s208 + $0x78] sm:$0xff]
        %v335 = vld [vmem:[%s208 + $0x80] sm:$0xff]
        %v336 = vld [vmem:[%s208 + $0x88] sm:$0xff]
        %v337 = vld [vmem:[%s208 + $0x90] sm:$0xff]
        %v338 = vld [vmem:[%s208 + $0x98] sm:$0xff]
        %v339 = vld [vmem:[%s208 + $0xa0] sm:$0xff]
        %v340 = vld [vmem:[%s208 + $0xa8] sm:$0xff]
        %v341 = vld [vmem:[%s208 + $0xb0] sm:$0xff]
        %v342 = vld [vmem:[%s208 + $0xb8] sm:$0xff]
        %v343 = vld [vmem:[%s208 + $0xc0] sm:$0xff]
        %v344 = vld [vmem:[%s208 + $0xc8] sm:$0xff]
        %v345 = vld [vmem:[%s208 + $0xd0] sm:$0xff]
        %v346 = vld [vmem:[%s208 + $0xd8] sm:$0xff]
        %v347 = vld [vmem:[%s208 + $0xe0] sm:$0xff]
        %v348 = vld [vmem:[%s208 + $0xe8] sm:$0xff]
        %v349 = vld [vmem:[%s208 + $0xf0] sm:$0xff]
        %v350 = vld [vmem:[%s208 + $0xf8] sm:$0xff]
        %v351 = vld [vmem:[%s208 + $0x100] sm:$0xff]
        %v352 = vld [vmem:[%s208 + $0x108] sm:$0xff]
        %v353 = vld [vmem:[%s208 + $0x110] sm:$0xff]
        %v354 = vld [vmem:[%s208 + $0x118] sm:$0xff]
        %v355 = vld [vmem:[%s208 + $0x120] sm:$0xff]
        %v356 = vld [vmem:[%s208 + $0x128] sm:$0xff]
        %v357 = vld [vmem:[%s208 + $0x130] sm:$0xff]
        %v358 = vld [vmem:[%s208 + $0x138] sm:$0xff]
        %v359 = vld [vmem:[%s208 + $0x140] sm:$0xff]
        %v360 = vld [vmem:[%s208 + $0x148] sm:$0xff]
        %v361 = vld [vmem:[%s208 + $0x150] sm:$0xff]
        %v362 = vld [vmem:[%s208 + $0x158] sm:$0xff]
        %v363 = vld [vmem:[%s208 + $0x160] sm:$0xff]
        %v364 = vld [vmem:[%s208 + $0x168] sm:$0xff]
        %v365 = vld [vmem:[%s208 + $0x170] sm:$0xff]
        %v366 = vld [vmem:[%s208 + $0x178] sm:$0xff]
        %v367 = vld [vmem:[%s208 + $0x180] sm:$0xff]
        %v368 = vld [vmem:[%s208 + $0x188] sm:$0xff]
        %v369 = vld [vmem:[%s208 + $0x190] sm:$0xff]
        %v370 = vld [vmem:[%s208 + $0x198] sm:$0xff]
        %v371 = vld [vmem:[%s208 + $0x1a0] sm:$0xff]
        %v372 = vld [vmem:[%s208 + $0x1a8] sm:$0xff]
        %v373 = vld [vmem:[%s208 + $0x1b0] sm:$0xff]
        %v374 = vld [vmem:[%s208 + $0x1b8] sm:$0xff]
        %v375 = vld [vmem:[%s208 + $0x1c0] sm:$0xff]
        %v376 = vld [vmem:[%s208 + $0x1c8] sm:$0xff]
        %v377 = vld [vmem:[%s208 + $0x1d0] sm:$0xff]
        %v378 = vld [vmem:[%s208 + $0x1d8] sm:$0xff]
        %v379 = vld [vmem:[%s208 + $0x1e0] sm:$0xff]
        %v380 = vld [vmem:[%s208 + $0x1e8] sm:$0xff]
        %v381 = vld [vmem:[%s208 + $0x1f0] sm:$0xff]
        %v382 = vld [vmem:[%s208 + $0x1f8] sm:$0xff]
        %383 = vmatpush.xpose.msra.mxu0 %v379
        %384 = vmatpush.xpose.msra.mxu0 %v375
        %385 = vmatpush.xpose.msra.mxu0 %v371
        %386 = vmatpush.xpose.msra.mxu0 %v367
        %387 = vmatpush.xpose.msra.mxu0 %v363
        %388 = vmatpush.xpose.msra.mxu0 %v359
        %389 = vmatpush.xpose.msra.mxu0 %v355
        %390 = vmatpush.xpose.msra.mxu0 %v351
        %391 = vmatpush.xpose.msra.mxu0 %v347
        %392 = vmatpush.xpose.msra.mxu0 %v343
        %393 = vmatpush.xpose.msra.mxu0 %v339
        %394 = vmatpush.xpose.msra.mxu0 %v335
        %395 = vmatpush.xpose.msra.mxu0 %v331
        %396 = vmatpush.xpose.msra.mxu0 %v327
        %397 = vmatpush.xpose.msra.mxu0 %v323
        %398 = vmatpush.xpose.msra.mxu0 %v319
        %399 = vmatmul.f32.gmra.mxu0 %v255
        %v400 = vpop.f32.mrf.mxu0
        %v401 = vadd.f32 0.0, %v400
        %402 = vmatmul.f32.gmra.mxu0 %v259
        %v403 = vpop.f32.mrf.mxu0
        %v404 = vadd.f32 0.0, %v403
        %405 = vmatmul.f32.gmra.mxu0 %v263
        %v406 = vpop.f32.mrf.mxu0
        %v407 = vadd.f32 0.0, %v406
        %408 = vmatmul.f32.gmra.mxu0 %v267
        %v409 = vpop.f32.mrf.mxu0
        %v410 = vadd.f32 0.0, %v409
        %411 = vmatmul.f32.gmra.mxu0 %v271
        %v412 = vpop.f32.mrf.mxu0
        %v413 = vadd.f32 0.0, %v412
        %414 = vmatmul.f32.gmra.mxu0 %v275
        %v415 = vpop.f32.mrf.mxu0
        %v416 = vadd.f32 0.0, %v415
        %417 = vmatmul.f32.gmra.mxu0 %v279
        %v418 = vpop.f32.mrf.mxu0
        %v419 = vadd.f32 0.0, %v418
        %420 = vmatmul.f32.gmra.mxu0 %v283
        %v421 = vpop.f32.mrf.mxu0
        %v422 = vadd.f32 0.0, %v421
        %423 = vmatmul.f32.gmra.mxu0 %v287
        %v424 = vpop.f32.mrf.mxu0
        %v425 = vadd.f32 0.0, %v424
        %426 = vmatmul.f32.gmra.mxu0 %v291
        %v427 = vpop.f32.mrf.mxu0
        %v428 = vadd.f32 0.0, %v427
        %429 = vmatmul.f32.gmra.mxu0 %v295
        %v430 = vpop.f32.mrf.mxu0
        %v431 = vadd.f32 0.0, %v430
        %432 = vmatmul.f32.gmra.mxu0 %v299
        %v433 = vpop.f32.mrf.mxu0
        %v434 = vadd.f32 0.0, %v433
        %435 = vmatmul.f32.gmra.mxu0 %v303
        %v436 = vpop.f32.mrf.mxu0
        %v437 = vadd.f32 0.0, %v436
        %438 = vmatmul.f32.gmra.mxu0 %v307
        %v439 = vpop.f32.mrf.mxu0
        %v440 = vadd.f32 0.0, %v439
        %441 = vmatmul.f32.gmra.mxu0 %v311
        %v442 = vpop.f32.mrf.mxu0
        %v443 = vadd.f32 0.0, %v442
        %444 = vmatmul.f32.gmra.mxu0 %v315
        %v445 = vpop.f32.mrf.mxu0
        %v446 = vadd.f32 0.0, %v445
        %447 = vdwg.mxu0
        %448 = vmatpush.xpose.msra.mxu0 %v380
        %449 = vmatpush.xpose.msra.mxu0 %v376
        %450 = vmatpush.xpose.msra.mxu0 %v372
        %451 = vmatpush.xpose.msra.mxu0 %v368
        %452 = vmatpush.xpose.msra.mxu0 %v364
        %453 = vmatpush.xpose.msra.mxu0 %v360
        %454 = vmatpush.xpose.msra.mxu0 %v356
        %455 = vmatpush.xpose.msra.mxu0 %v352
        %456 = vmatpush.xpose.msra.mxu0 %v348
        %457 = vmatpush.xpose.msra.mxu0 %v344
        %458 = vmatpush.xpose.msra.mxu0 %v340
        %459 = vmatpush.xpose.msra.mxu0 %v336
        %460 = vmatpush.xpose.msra.mxu0 %v332
        %461 = vmatpush.xpose.msra.mxu0 %v328
        %462 = vmatpush.xpose.msra.mxu0 %v324
        %463 = vmatpush.xpose.msra.mxu0 %v320
        %464 = vmatmul.f32.gmra.mxu0 %v256
        %v465 = vpop.f32.mrf.mxu0
        %v466 = vadd.f32 %v401, %v465
        %467 = vmatmul.f32.gmra.mxu0 %v260
        %v468 = vpop.f32.mrf.mxu0
        %v469 = vadd.f32 %v404, %v468
        %470 = vmatmul.f32.gmra.mxu0 %v264
        %v471 = vpop.f32.mrf.mxu0
        %v472 = vadd.f32 %v407, %v471
        %473 = vmatmul.f32.gmra.mxu0 %v268
        %v474 = vpop.f32.mrf.mxu0
        %v475 = vadd.f32 %v410, %v474
        %476 = vmatmul.f32.gmra.mxu0 %v272
        %v477 = vpop.f32.mrf.mxu0
        %v478 = vadd.f32 %v413, %v477
        %479 = vmatmul.f32.gmra.mxu0 %v276
        %v480 = vpop.f32.mrf.mxu0
        %v481 = vadd.f32 %v416, %v480
        %482 = vmatmul.f32.gmra.mxu0 %v280
        %v483 = vpop.f32.mrf.mxu0
        %v484 = vadd.f32 %v419, %v483
        %485 = vmatmul.f32.gmra.mxu0 %v284
        %v486 = vpop.f32.mrf.mxu0
        %v487 = vadd.f32 %v422, %v486
        %488 = vmatmul.f32.gmra.mxu0 %v288
        %v489 = vpop.f32.mrf.mxu0
        %v490 = vadd.f32 %v425, %v489
        %491 = vmatmul.f32.gmra.mxu0 %v292
        %v492 = vpop.f32.mrf.mxu0
        %v493 = vadd.f32 %v428, %v492
        %494 = vmatmul.f32.gmra.mxu0 %v296
        %v495 = vpop.f32.mrf.mxu0
        %v496 = vadd.f32 %v431, %v495
        %497 = vmatmul.f32.gmra.mxu0 %v300
        %v498 = vpop.f32.mrf.mxu0
        %v499 = vadd.f32 %v434, %v498
        %500 = vmatmul.f32.gmra.mxu0 %v304
        %v501 = vpop.f32.mrf.mxu0
        %v502 = vadd.f32 %v437, %v501
        %503 = vmatmul.f32.gmra.mxu0 %v308
        %v504 = vpop.f32.mrf.mxu0
        %v505 = vadd.f32 %v440, %v504
        %506 = vmatmul.f32.gmra.mxu0 %v312
        %v507 = vpop.f32.mrf.mxu0
        %v508 = vadd.f32 %v443, %v507
        %509 = vmatmul.f32.gmra.mxu0 %v316
        %v510 = vpop.f32.mrf.mxu0
        %v511 = vadd.f32 %v446, %v510
        %512 = vdwg.mxu0
        %513 = vmatpush.xpose.msra.mxu0 %v381
        %514 = vmatpush.xpose.msra.mxu0 %v377
        %515 = vmatpush.xpose.msra.mxu0 %v373
        %516 = vmatpush.xpose.msra.mxu0 %v369
        %517 = vmatpush.xpose.msra.mxu0 %v365
        %518 = vmatpush.xpose.msra.mxu0 %v361
        %519 = vmatpush.xpose.msra.mxu0 %v357
        %520 = vmatpush.xpose.msra.mxu0 %v353
        %521 = vmatpush.xpose.msra.mxu0 %v349
        %522 = vmatpush.xpose.msra.mxu0 %v345
        %523 = vmatpush.xpose.msra.mxu0 %v341
        %524 = vmatpush.xpose.msra.mxu0 %v337
        %525 = vmatpush.xpose.msra.mxu0 %v333
        %526 = vmatpush.xpose.msra.mxu0 %v329
        %527 = vmatpush.xpose.msra.mxu0 %v325
        %528 = vmatpush.xpose.msra.mxu0 %v321
        %529 = vmatmul.f32.gmra.mxu0 %v257
        %v530 = vpop.f32.mrf.mxu0
        %v531 = vadd.f32 %v466, %v530
        %532 = vmatmul.f32.gmra.mxu0 %v261
        %v533 = vpop.f32.mrf.mxu0
        %v534 = vadd.f32 %v469, %v533
        %535 = vmatmul.f32.gmra.mxu0 %v265
        %v536 = vpop.f32.mrf.mxu0
        %v537 = vadd.f32 %v472, %v536
        %538 = vmatmul.f32.gmra.mxu0 %v269
        %v539 = vpop.f32.mrf.mxu0
        %v540 = vadd.f32 %v475, %v539
        %541 = vmatmul.f32.gmra.mxu0 %v273
        %v542 = vpop.f32.mrf.mxu0
        %v543 = vadd.f32 %v478, %v542
        %544 = vmatmul.f32.gmra.mxu0 %v277
        %v545 = vpop.f32.mrf.mxu0
        %v546 = vadd.f32 %v481, %v545
        %547 = vmatmul.f32.gmra.mxu0 %v281
        %v548 = vpop.f32.mrf.mxu0
        %v549 = vadd.f32 %v484, %v548
        %550 = vmatmul.f32.gmra.mxu0 %v285
        %v551 = vpop.f32.mrf.mxu0
        %v552 = vadd.f32 %v487, %v551
        %553 = vmatmul.f32.gmra.mxu0 %v289
        %v554 = vpop.f32.mrf.mxu0
        %v555 = vadd.f32 %v490, %v554
        %556 = vmatmul.f32.gmra.mxu0 %v293
        %v557 = vpop.f32.mrf.mxu0
        %v558 = vadd.f32 %v493, %v557
        %559 = vmatmul.f32.gmra.mxu0 %v297
        %v560 = vpop.f32.mrf.mxu0
        %v561 = vadd.f32 %v496, %v560
        %562 = vmatmul.f32.gmra.mxu0 %v301
        %v563 = vpop.f32.mrf.mxu0
        %v564 = vadd.f32 %v499, %v563
        %565 = vmatmul.f32.gmra.mxu0 %v305
        %v566 = vpop.f32.mrf.mxu0
        %v567 = vadd.f32 %v502, %v566
        %568 = vmatmul.f32.gmra.mxu0 %v309
        %v569 = vpop.f32.mrf.mxu0
        %v570 = vadd.f32 %v505, %v569
        %571 = vmatmul.f32.gmra.mxu0 %v313
        %v572 = vpop.f32.mrf.mxu0
        %v573 = vadd.f32 %v508, %v572
        %574 = vmatmul.f32.gmra.mxu0 %v317
        %v575 = vpop.f32.mrf.mxu0
        %v576 = vadd.f32 %v511, %v575
        %577 = vdwg.mxu0
        %578 = vmatpush.xpose.msra.mxu0 %v382
        %579 = vmatpush.xpose.msra.mxu0 %v378
        %580 = vmatpush.xpose.msra.mxu0 %v374
        %581 = vmatpush.xpose.msra.mxu0 %v370
        %582 = vmatpush.xpose.msra.mxu0 %v366
        %583 = vmatpush.xpose.msra.mxu0 %v362
        %584 = vmatpush.xpose.msra.mxu0 %v358
        %585 = vmatpush.xpose.msra.mxu0 %v354
        %586 = vmatpush.xpose.msra.mxu0 %v350
        %587 = vmatpush.xpose.msra.mxu0 %v346
        %588 = vmatpush.xpose.msra.mxu0 %v342
        %589 = vmatpush.xpose.msra.mxu0 %v338
        %590 = vmatpush.xpose.msra.mxu0 %v334
        %591 = vmatpush.xpose.msra.mxu0 %v330
        %592 = vmatpush.xpose.msra.mxu0 %v326
        %593 = vmatpush.xpose.msra.mxu0 %v322
        %594 = vmatmul.f32.gmra.mxu0 %v258
        %v595 = vpop.f32.mrf.mxu0
        %v596 = vadd.f32 %v531, %v595
        %597 = vmatmul.f32.gmra.mxu0 %v262
        %v598 = vpop.f32.mrf.mxu0
        %v599 = vadd.f32 %v534, %v598
        %600 = vmatmul.f32.gmra.mxu0 %v266
        %v601 = vpop.f32.mrf.mxu0
        %v602 = vadd.f32 %v537, %v601
        %603 = vmatmul.f32.gmra.mxu0 %v270
        %v604 = vpop.f32.mrf.mxu0
        %v605 = vadd.f32 %v540, %v604
        %606 = vmatmul.f32.gmra.mxu0 %v274
        %v607 = vpop.f32.mrf.mxu0
        %v608 = vadd.f32 %v543, %v607
        %609 = vmatmul.f32.gmra.mxu0 %v278
        %v610 = vpop.f32.mrf.mxu0
        %v611 = vadd.f32 %v546, %v610
        %612 = vmatmul.f32.gmra.mxu0 %v282
        %v613 = vpop.f32.mrf.mxu0
        %v614 = vadd.f32 %v549, %v613
        %615 = vmatmul.f32.gmra.mxu0 %v286
        %v616 = vpop.f32.mrf.mxu0
        %v617 = vadd.f32 %v552, %v616
        %618 = vmatmul.f32.gmra.mxu0 %v290
        %v619 = vpop.f32.mrf.mxu0
        %v620 = vadd.f32 %v555, %v619
        %621 = vmatmul.f32.gmra.mxu0 %v294
        %v622 = vpop.f32.mrf.mxu0
        %v623 = vadd.f32 %v558, %v622
        %624 = vmatmul.f32.gmra.mxu0 %v298
        %v625 = vpop.f32.mrf.mxu0
        %v626 = vadd.f32 %v561, %v625
        %627 = vmatmul.f32.gmra.mxu0 %v302
        %v628 = vpop.f32.mrf.mxu0
        %v629 = vadd.f32 %v564, %v628
        %630 = vmatmul.f32.gmra.mxu0 %v306
        %v631 = vpop.f32.mrf.mxu0
        %v632 = vadd.f32 %v567, %v631
        %633 = vmatmul.f32.gmra.mxu0 %v310
        %v634 = vpop.f32.mrf.mxu0
        %v635 = vadd.f32 %v570, %v634
        %636 = vmatmul.f32.gmra.mxu0 %v314
        %v637 = vpop.f32.mrf.mxu0
        %v638 = vadd.f32 %v573, %v637
        %639 = vmatmul.f32.gmra.mxu0 %v318
        %v640 = vpop.f32.mrf.mxu0
        %v641 = vadd.f32 %v576, %v640
        %642 = vdwg.mxu0
        %v643 = vmul.f32 %v255, %v255
        %v644 = vmul.f32 %v256, %v256
        %v645 = vmul.f32 %v257, %v257
        %v646 = vmul.f32 %v258, %v258
        %v647 = vmul.f32 %v259, %v259
        %v648 = vmul.f32 %v260, %v260
        %v649 = vmul.f32 %v261, %v261
        %v650 = vmul.f32 %v262, %v262
        %v651 = vmul.f32 %v263, %v263
        %v652 = vmul.f32 %v264, %v264
        %v653 = vmul.f32 %v265, %v265
        %v654 = vmul.f32 %v266, %v266
        %v655 = vmul.f32 %v267, %v267
        %v656 = vmul.f32 %v268, %v268
        %v657 = vmul.f32 %v269, %v269
        %v658 = vmul.f32 %v270, %v270
        %v659 = vmul.f32 %v271, %v271
        %v660 = vmul.f32 %v272, %v272
        %v661 = vmul.f32 %v273, %v273
        %v662 = vmul.f32 %v274, %v274
        %v663 = vmul.f32 %v275, %v275
        %v664 = vmul.f32 %v276, %v276
        %v665 = vmul.f32 %v277, %v277
        %v666 = vmul.f32 %v278, %v278
        %v667 = vmul.f32 %v279, %v279
        %v668 = vmul.f32 %v280, %v280
        %v669 = vmul.f32 %v281, %v281
        %v670 = vmul.f32 %v282, %v282
        %v671 = vmul.f32 %v283, %v283
        %v672 = vmul.f32 %v284, %v284
        %v673 = vmul.f32 %v285, %v285
        %v674 = vmul.f32 %v286, %v286
        %v675 = vmul.f32 %v287, %v287
        %v676 = vmul.f32 %v288, %v288
        %v677 = vmul.f32 %v289, %v289
        %v678 = vmul.f32 %v290, %v290
        %v679 = vmul.f32 %v291, %v291
        %v680 = vmul.f32 %v292, %v292
        %v681 = vmul.f32 %v293, %v293
        %v682 = vmul.f32 %v294, %v294
        %v683 = vmul.f32 %v295, %v295
        %v684 = vmul.f32 %v296, %v296
        %v685 = vmul.f32 %v297, %v297
        %v686 = vmul.f32 %v298, %v298
        %v687 = vmul.f32 %v299, %v299
        %v688 = vmul.f32 %v300, %v300
        %v689 = vmul.f32 %v301, %v301
        %v690 = vmul.f32 %v302, %v302
        %v691 = vmul.f32 %v303, %v303
        %v692 = vmul.f32 %v304, %v304
        %v693 = vmul.f32 %v305, %v305
        %v694 = vmul.f32 %v306, %v306
        %v695 = vmul.f32 %v307, %v307
        %v696 = vmul.f32 %v308, %v308
        %v697 = vmul.f32 %v309, %v309
        %v698 = vmul.f32 %v310, %v310
        %v699 = vmul.f32 %v311, %v311
        %v700 = vmul.f32 %v312, %v312
        %v701 = vmul.f32 %v313, %v313
        %v702 = vmul.f32 %v314, %v314
        %v703 = vmul.f32 %v315, %v315
        %v704 = vmul.f32 %v316, %v316
        %v705 = vmul.f32 %v317, %v317
        %v706 = vmul.f32 %v318, %v318
        %v707 = vadd.f32 %v643, %v644
        %v708 = vadd.f32 %v707, %v645
        %v709 = vadd.f32 %v708, %v646
        %710 = vadd.xlane.f32.xlu0 %v709
        %v711 = vpop.xlane.xlu0 %710
        %v712 = vadd.f32 %v647, %v648
        %v713 = vadd.f32 %v712, %v649
        %v714 = vadd.f32 %v713, %v650
        %715 = vadd.xlane.f32.xlu0 %v714
        %v716 = vpop.xlane.xlu0 %715
        %v717 = vadd.f32 %v651, %v652
        %v718 = vadd.f32 %v717, %v653
        %v719 = vadd.f32 %v718, %v654
        %720 = vadd.xlane.f32.xlu0 %v719
        %v721 = vpop.xlane.xlu0 %720
        %v722 = vadd.f32 %v655, %v656
        %v723 = vadd.f32 %v722, %v657
        %v724 = vadd.f32 %v723, %v658
        %725 = vadd.xlane.f32.xlu0 %v724
        %v726 = vpop.xlane.xlu0 %725
        %v727 = vadd.f32 %v659, %v660
        %v728 = vadd.f32 %v727, %v661
        %v729 = vadd.f32 %v728, %v662
        %730 = vadd.xlane.f32.xlu0 %v729
        %v731 = vpop.xlane.xlu0 %730
        %v732 = vadd.f32 %v663, %v664
        %v733 = vadd.f32 %v732, %v665
        %v734 = vadd.f32 %v733, %v666
        %735 = vadd.xlane.f32.xlu0 %v734
        %v736 = vpop.xlane.xlu0 %735
        %v737 = vadd.f32 %v667, %v668
        %v738 = vadd.f32 %v737, %v669
        %v739 = vadd.f32 %v738, %v670
        %740 = vadd.xlane.f32.xlu0 %v739
        %v741 = vpop.xlane.xlu0 %740
        %v742 = vadd.f32 %v671, %v672
        %v743 = vadd.f32 %v742, %v673
        %v744 = vadd.f32 %v743, %v674
        %745 = vadd.xlane.f32.xlu0 %v744
        %v746 = vpop.xlane.xlu0 %745
        %v747 = vadd.f32 %v675, %v676
        %v748 = vadd.f32 %v747, %v677
        %v749 = vadd.f32 %v748, %v678
        %750 = vadd.xlane.f32.xlu0 %v749
        %v751 = vpop.xlane.xlu0 %750
        %v752 = vadd.f32 %v679, %v680
        %v753 = vadd.f32 %v752, %v681
        %v754 = vadd.f32 %v753, %v682
        %755 = vadd.xlane.f32.xlu0 %v754
        %v756 = vpop.xlane.xlu0 %755
        %v757 = vadd.f32 %v683, %v684
        %v758 = vadd.f32 %v757, %v685
        %v759 = vadd.f32 %v758, %v686
        %760 = vadd.xlane.f32.xlu0 %v759
        %v761 = vpop.xlane.xlu0 %760
        %v762 = vadd.f32 %v687, %v688
        %v763 = vadd.f32 %v762, %v689
        %v764 = vadd.f32 %v763, %v690
        %765 = vadd.xlane.f32.xlu0 %v764
        %v766 = vpop.xlane.xlu0 %765
        %v767 = vadd.f32 %v691, %v692
        %v768 = vadd.f32 %v767, %v693
        %v769 = vadd.f32 %v768, %v694
        %770 = vadd.xlane.f32.xlu0 %v769
        %v771 = vpop.xlane.xlu0 %770
        %v772 = vadd.f32 %v695, %v696
        %v773 = vadd.f32 %v772, %v697
        %v774 = vadd.f32 %v773, %v698
        %775 = vadd.xlane.f32.xlu0 %v774
        %v776 = vpop.xlane.xlu0 %775
        %v777 = vadd.f32 %v699, %v700
        %v778 = vadd.f32 %v777, %v701
        %v779 = vadd.f32 %v778, %v702
        %780 = vadd.xlane.f32.xlu0 %v779
        %v781 = vpop.xlane.xlu0 %780
        %v782 = vadd.f32 %v703, %v704
        %v783 = vadd.f32 %v782, %v705
        %v784 = vadd.f32 %v783, %v706
        %785 = vadd.xlane.f32.xlu0 %v784
        %v786 = vpop.xlane.xlu0 %785
        %v787 = vmul.f32 %v319, %v319
        %v788 = vmul.f32 %v320, %v320
        %v789 = vmul.f32 %v321, %v321
        %v790 = vmul.f32 %v322, %v322
        %v791 = vmul.f32 %v323, %v323
        %v792 = vmul.f32 %v324, %v324
        %v793 = vmul.f32 %v325, %v325
        %v794 = vmul.f32 %v326, %v326
        %v795 = vmul.f32 %v327, %v327
        %v796 = vmul.f32 %v328, %v328
        %v797 = vmul.f32 %v329, %v329
        %v798 = vmul.f32 %v330, %v330
        %v799 = vmul.f32 %v331, %v331
        %v800 = vmul.f32 %v332, %v332
        %v801 = vmul.f32 %v333, %v333
        %v802 = vmul.f32 %v334, %v334
        %v803 = vmul.f32 %v335, %v335
        %v804 = vmul.f32 %v336, %v336
        %v805 = vmul.f32 %v337, %v337
        %v806 = vmul.f32 %v338, %v338
        %v807 = vmul.f32 %v339, %v339
        %v808 = vmul.f32 %v340, %v340
        %v809 = vmul.f32 %v341, %v341
        %v810 = vmul.f32 %v342, %v342
        %v811 = vmul.f32 %v343, %v343
        %v812 = vmul.f32 %v344, %v344
        %v813 = vmul.f32 %v345, %v345
        %v814 = vmul.f32 %v346, %v346
        %v815 = vmul.f32 %v347, %v347
        %v816 = vmul.f32 %v348, %v348
        %v817 = vmul.f32 %v349, %v349
        %v818 = vmul.f32 %v350, %v350
        %v819 = vmul.f32 %v351, %v351
        %v820 = vmul.f32 %v352, %v352
        %v821 = vmul.f32 %v353, %v353
        %v822 = vmul.f32 %v354, %v354
        %v823 = vmul.f32 %v355, %v355
        %v824 = vmul.f32 %v356, %v356
        %v825 = vmul.f32 %v357, %v357
        %v826 = vmul.f32 %v358, %v358
        %v827 = vmul.f32 %v359, %v359
        %v828 = vmul.f32 %v360, %v360
        %v829 = vmul.f32 %v361, %v361
        %v830 = vmul.f32 %v362, %v362
        %v831 = vmul.f32 %v363, %v363
        %v832 = vmul.f32 %v364, %v364
        %v833 = vmul.f32 %v365, %v365
        %v834 = vmul.f32 %v366, %v366
        %v835 = vmul.f32 %v367, %v367
        %v836 = vmul.f32 %v368, %v368
        %v837 = vmul.f32 %v369, %v369
        %v838 = vmul.f32 %v370, %v370
        %v839 = vmul.f32 %v371, %v371
        %v840 = vmul.f32 %v372, %v372
        %v841 = vmul.f32 %v373, %v373
        %v842 = vmul.f32 %v374, %v374
        %v843 = vmul.f32 %v375, %v375
        %v844 = vmul.f32 %v376, %v376
        %v845 = vmul.f32 %v377, %v377
        %v846 = vmul.f32 %v378, %v378
        %v847 = vmul.f32 %v379, %v379
        %v848 = vmul.f32 %v380, %v380
        %v849 = vmul.f32 %v381, %v381
        %v850 = vmul.f32 %v382, %v382
        %v851 = vadd.f32 %v787, %v788
        %v852 = vadd.f32 %v851, %v789
        %v853 = vadd.f32 %v852, %v790
        %854 = vadd.xlane.f32.xlu0 %v853
        %v855 = vpop.xlane.xlu0 %854
        %v856 = vadd.f32 %v791, %v792
        %v857 = vadd.f32 %v856, %v793
        %v858 = vadd.f32 %v857, %v794
        %859 = vadd.xlane.f32.xlu0 %v858
        %v860 = vpop.xlane.xlu0 %859
        %v861 = vadd.f32 %v795, %v796
        %v862 = vadd.f32 %v861, %v797
        %v863 = vadd.f32 %v862, %v798
        %864 = vadd.xlane.f32.xlu0 %v863
        %v865 = vpop.xlane.xlu0 %864
        %v866 = vadd.f32 %v799, %v800
        %v867 = vadd.f32 %v866, %v801
        %v868 = vadd.f32 %v867, %v802
        %869 = vadd.xlane.f32.xlu0 %v868
        %v870 = vpop.xlane.xlu0 %869
        %v871 = vadd.f32 %v803, %v804
        %v872 = vadd.f32 %v871, %v805
        %v873 = vadd.f32 %v872, %v806
        %874 = vadd.xlane.f32.xlu0 %v873
        %v875 = vpop.xlane.xlu0 %874
        %v876 = vadd.f32 %v807, %v808
        %v877 = vadd.f32 %v876, %v809
        %v878 = vadd.f32 %v877, %v810
        %879 = vadd.xlane.f32.xlu0 %v878
        %v880 = vpop.xlane.xlu0 %879
        %v881 = vadd.f32 %v811, %v812
        %v882 = vadd.f32 %v881, %v813
        %v883 = vadd.f32 %v882, %v814
        %884 = vadd.xlane.f32.xlu0 %v883
        %v885 = vpop.xlane.xlu0 %884
        %v886 = vadd.f32 %v815, %v816
        %v887 = vadd.f32 %v886, %v817
        %v888 = vadd.f32 %v887, %v818
        %889 = vadd.xlane.f32.xlu0 %v888
        %v890 = vpop.xlane.xlu0 %889
        %v891 = vadd.f32 %v819, %v820
        %v892 = vadd.f32 %v891, %v821
        %v893 = vadd.f32 %v892, %v822
        %894 = vadd.xlane.f32.xlu0 %v893
        %v895 = vpop.xlane.xlu0 %894
        %v896 = vadd.f32 %v823, %v824
        %v897 = vadd.f32 %v896, %v825
        %v898 = vadd.f32 %v897, %v826
        %899 = vadd.xlane.f32.xlu0 %v898
        %v900 = vpop.xlane.xlu0 %899
        %v901 = vadd.f32 %v827, %v828
        %v902 = vadd.f32 %v901, %v829
        %v903 = vadd.f32 %v902, %v830
        %904 = vadd.xlane.f32.xlu0 %v903
        %v905 = vpop.xlane.xlu0 %904
        %v906 = vadd.f32 %v831, %v832
        %v907 = vadd.f32 %v906, %v833
        %v908 = vadd.f32 %v907, %v834
        %909 = vadd.xlane.f32.xlu0 %v908
        %v910 = vpop.xlane.xlu0 %909
        %v911 = vadd.f32 %v835, %v836
        %v912 = vadd.f32 %v911, %v837
        %v913 = vadd.f32 %v912, %v838
        %914 = vadd.xlane.f32.xlu0 %v913
        %v915 = vpop.xlane.xlu0 %914
        %v916 = vadd.f32 %v839, %v840
        %v917 = vadd.f32 %v916, %v841
        %v918 = vadd.f32 %v917, %v842
        %919 = vadd.xlane.f32.xlu0 %v918
        %v920 = vpop.xlane.xlu0 %919
        %v921 = vadd.f32 %v843, %v844
        %v922 = vadd.f32 %v921, %v845
        %v923 = vadd.f32 %v922, %v846
        %924 = vadd.xlane.f32.xlu0 %v923
        %v925 = vpop.xlane.xlu0 %924
        %v926 = vadd.f32 %v847, %v848
        %v927 = vadd.f32 %v926, %v849
        %v928 = vadd.f32 %v927, %v850
        %929 = vadd.xlane.f32.xlu0 %v928
        %v930 = vpop.xlane.xlu0 %929
        %v931 = vld [vmem:[#allocation2] sm:$0xff]
        %v932 = vld [vmem:[#allocation2 + $0x8] sm:$0xff]
        %v933 = vld [vmem:[#allocation2 + $0x10] sm:$0xff]
        %v934 = vld [vmem:[#allocation2 + $0x18] sm:$0xff]
        %v935 = vld [vmem:[#allocation2 + $0x20] sm:$0xff]
        %v936 = vld [vmem:[#allocation2 + $0x28] sm:$0xff]
        %v937 = vld [vmem:[#allocation2 + $0x30] sm:$0xff]
        %v938 = vld [vmem:[#allocation2 + $0x38] sm:$0xff]
        %v939 = vld [vmem:[#allocation2 + $0x40] sm:$0xff]
        %v940 = vld [vmem:[#allocation2 + $0x48] sm:$0xff]
        %v941 = vld [vmem:[#allocation2 + $0x50] sm:$0xff]
        %v942 = vld [vmem:[#allocation2 + $0x58] sm:$0xff]
        %v943 = vld [vmem:[#allocation2 + $0x60] sm:$0xff]
        %v944 = vld [vmem:[#allocation2 + $0x68] sm:$0xff]
        %v945 = vld [vmem:[#allocation2 + $0x70] sm:$0xff]
        %v946 = vld [vmem:[#allocation2 + $0x78] sm:$0xff]
        %v947 = vmul.f32 %v596, 2.0
        %v948 = vmul.f32 %v599, 2.0
        %v949 = vmul.f32 %v602, 2.0
        %v950 = vmul.f32 %v605, 2.0
        %v951 = vmul.f32 %v608, 2.0
        %v952 = vmul.f32 %v611, 2.0
        %v953 = vmul.f32 %v614, 2.0
        %v954 = vmul.f32 %v617, 2.0
        %v955 = vmul.f32 %v620, 2.0
        %v956 = vmul.f32 %v623, 2.0
        %v957 = vmul.f32 %v626, 2.0
        %v958 = vmul.f32 %v629, 2.0
        %v959 = vmul.f32 %v632, 2.0
        %v960 = vmul.f32 %v635, 2.0
        %v961 = vmul.f32 %v638, 2.0
        %v962 = vmul.f32 %v641, 2.0
        %v963 = vsub.f32 %v711, %v947
        %v964 = vsub.f32 %v716, %v948
        %v965 = vsub.f32 %v721, %v949
        %v966 = vsub.f32 %v726, %v950
        %v967 = vsub.f32 %v731, %v951
        %v968 = vsub.f32 %v736, %v952
        %v969 = vsub.f32 %v741, %v953
        %v970 = vsub.f32 %v746, %v954
        %v971 = vsub.f32 %v751, %v955
        %v972 = vsub.f32 %v756, %v956
        %v973 = vsub.f32 %v761, %v957
        %v974 = vsub.f32 %v766, %v958
        %v975 = vsub.f32 %v771, %v959
        %v976 = vsub.f32 %v776, %v960
        %v977 = vsub.f32 %v781, %v961
        %v978 = vsub.f32 %v786, %v962
        %979 = vxpose.xlu0.b32.start [1/16] %v855, 128
        %980 = vxpose.xlu0.b32.cont [2/16] %v860, 128
        %981 = vxpose.xlu0.b32.cont [3/16] %v865, 128
        %982 = vxpose.xlu0.b32.cont [4/16] %v870, 128
        %983 = vxpose.xlu0.b32.cont [5/16] %v875, 128
        %984 = vxpose.xlu0.b32.cont [6/16] %v880, 128
        %985 = vxpose.xlu0.b32.cont [7/16] %v885, 128
        %986 = vxpose.xlu0.b32.cont [8/16] %v890, 128
        %987 = vxpose.xlu0.b32.cont [9/16] %v895, 128
        %988 = vxpose.xlu0.b32.cont [10/16] %v900, 128
        %989 = vxpose.xlu0.b32.cont [11/16] %v905, 128
        %990 = vxpose.xlu0.b32.cont [12/16] %v910, 128
        %991 = vxpose.xlu0.b32.cont [13/16] %v915, 128
        %992 = vxpose.xlu0.b32.cont [14/16] %v920, 128
        %993 = vxpose.xlu0.b32.cont [15/16] %v925, 128
        %994 = vxpose.xlu0.b32.end [16/16] %v930, 128
        %v995 = vpop.trf.xlu0
        %v996 = vpop.trf.xlu0
        %v997 = vpop.trf.xlu0
        %v998 = vpop.trf.xlu0
        %v999 = vpop.trf.xlu0
        %v1000 = vpop.trf.xlu0
        %v1001 = vpop.trf.xlu0
        %v1002 = vpop.trf.xlu0
        %v1003 = vpop.trf.xlu0
        %v1004 = vpop.trf.xlu0
        %v1005 = vpop.trf.xlu0
        %v1006 = vpop.trf.xlu0
        %v1007 = vpop.trf.xlu0
        %v1008 = vpop.trf.xlu0
        %v1009 = vpop.trf.xlu0
        %v1010 = vpop.trf.xlu0
        %v1011 = vperm.slane %v995, 0
        %v1012 = vadd.f32 %v963, %v1011
        %v1013 = vadd.f32 %v964, %v1011
        %v1014 = vadd.f32 %v965, %v1011
        %v1015 = vadd.f32 %v966, %v1011
        %v1016 = vadd.f32 %v967, %v1011
        %v1017 = vadd.f32 %v968, %v1011
        %v1018 = vadd.f32 %v969, %v1011
        %v1019 = vadd.f32 %v970, %v1011
        %v1020 = vadd.f32 %v971, %v1011
        %v1021 = vadd.f32 %v972, %v1011
        %v1022 = vadd.f32 %v973, %v1011
        %v1023 = vadd.f32 %v974, %v1011
        %v1024 = vadd.f32 %v975, %v1011
        %v1025 = vadd.f32 %v976, %v1011
        %v1026 = vadd.f32 %v977, %v1011
        %v1027 = vadd.f32 %v978, %v1011
        %v1028 = vadd.f32 %v931, %v1012
        %v1029 = vadd.f32 %v932, %v1013
        %v1030 = vadd.f32 %v933, %v1014
        %v1031 = vadd.f32 %v934, %v1015
        %v1032 = vadd.f32 %v935, %v1016
        %v1033 = vadd.f32 %v936, %v1017
        %v1034 = vadd.f32 %v937, %v1018
        %v1035 = vadd.f32 %v938, %v1019
        %v1036 = vadd.f32 %v939, %v1020
        %v1037 = vadd.f32 %v940, %v1021
        %v1038 = vadd.f32 %v941, %v1022
        %v1039 = vadd.f32 %v942, %v1023
        %v1040 = vadd.f32 %v943, %v1024
        %v1041 = vadd.f32 %v944, %v1025
        %v1042 = vadd.f32 %v945, %v1026
        %v1043 = vadd.f32 %v946, %v1027
        %1044 = vst [vmem:[#allocation2] sm:$0xff] %v1028
        %1045 = vst [vmem:[#allocation2 + $0x8] sm:$0xff] %v1029
        %1046 = vst [vmem:[#allocation2 + $0x10] sm:$0xff] %v1030
        %1047 = vst [vmem:[#allocation2 + $0x18] sm:$0xff] %v1031
        %1048 = vst [vmem:[#allocation2 + $0x20] sm:$0xff] %v1032
        %1049 = vst [vmem:[#allocation2 + $0x28] sm:$0xff] %v1033
        %1050 = vst [vmem:[#allocation2 + $0x30] sm:$0xff] %v1034
        %1051 = vst [vmem:[#allocation2 + $0x38] sm:$0xff] %v1035
        %1052 = vst [vmem:[#allocation2 + $0x40] sm:$0xff] %v1036
        %1053 = vst [vmem:[#allocation2 + $0x48] sm:$0xff] %v1037
        %1054 = vst [vmem:[#allocation2 + $0x50] sm:$0xff] %v1038
        %1055 = vst [vmem:[#allocation2 + $0x58] sm:$0xff] %v1039
        %1056 = vst [vmem:[#allocation2 + $0x60] sm:$0xff] %v1040
        %1057 = vst [vmem:[#allocation2 + $0x68] sm:$0xff] %v1041
        %1058 = vst [vmem:[#allocation2 + $0x70] sm:$0xff] %v1042
        %1059 = vst [vmem:[#allocation2 + $0x78] sm:$0xff] %v1043
        %p1060 = scmp.eq.s32.totalorder %s27, 1
        // Predicated region
        $region41: #{tpu_custom_call.1} parent=27 // pred_check
          %p1061 = pneg %p1060
        $region42: #{tpu_custom_call.1} parent=27 // pred_check_branch
          %1063 = sbr.rel (%p1061) target = $region44
        $region43: #{tpu_custom_call.1} parent=27 // pred_region
          %v1064 = vld [vmem:[#allocation2] sm:$0xff]
          %v1065 = vld [vmem:[#allocation2 + $0x8] sm:$0xff]
          %v1066 = vld [vmem:[#allocation2 + $0x10] sm:$0xff]
          %v1067 = vld [vmem:[#allocation2 + $0x18] sm:$0xff]
          %v1068 = vld [vmem:[#allocation2 + $0x20] sm:$0xff]
          %v1069 = vld [vmem:[#allocation2 + $0x28] sm:$0xff]
          %v1070 = vld [vmem:[#allocation2 + $0x30] sm:$0xff]
          %v1071 = vld [vmem:[#allocation2 + $0x38] sm:$0xff]
          %v1072 = vld [vmem:[#allocation2 + $0x40] sm:$0xff]
          %v1073 = vld [vmem:[#allocation2 + $0x48] sm:$0xff]
          %v1074 = vld [vmem:[#allocation2 + $0x50] sm:$0xff]
          %v1075 = vld [vmem:[#allocation2 + $0x58] sm:$0xff]
          %v1076 = vld [vmem:[#allocation2 + $0x60] sm:$0xff]
          %v1077 = vld [vmem:[#allocation2 + $0x68] sm:$0xff]
          %v1078 = vld [vmem:[#allocation2 + $0x70] sm:$0xff]
          %v1079 = vld [vmem:[#allocation2 + $0x78] sm:$0xff]
          %v1080 = vmax.f32 %v1064, 0.0
          %v1081 = vmax.f32 %v1065, 0.0
          %v1082 = vmax.f32 %v1066, 0.0
          %v1083 = vmax.f32 %v1067, 0.0
          %v1084 = vmax.f32 %v1068, 0.0
          %v1085 = vmax.f32 %v1069, 0.0
          %v1086 = vmax.f32 %v1070, 0.0
          %v1087 = vmax.f32 %v1071, 0.0
          %v1088 = vmax.f32 %v1072, 0.0
          %v1089 = vmax.f32 %v1073, 0.0
          %v1090 = vmax.f32 %v1074, 0.0
          %v1091 = vmax.f32 %v1075, 0.0
          %v1092 = vmax.f32 %v1076, 0.0
          %v1093 = vmax.f32 %v1077, 0.0
          %v1094 = vmax.f32 %v1078, 0.0
          %v1095 = vmax.f32 %v1079, 0.0
          %v1096 = vmul.f32 %v1080, -0.00048828125
          %v1097 = vmul.f32 %v1081, -0.00048828125
          %v1098 = vmul.f32 %v1082, -0.00048828125
          %v1099 = vmul.f32 %v1083, -0.00048828125
          %v1100 = vmul.f32 %v1084, -0.00048828125
          %v1101 = vmul.f32 %v1085, -0.00048828125
          %v1102 = vmul.f32 %v1086, -0.00048828125
          %v1103 = vmul.f32 %v1087, -0.00048828125
          %v1104 = vmul.f32 %v1088, -0.00048828125
          %v1105 = vmul.f32 %v1089, -0.00048828125
          %v1106 = vmul.f32 %v1090, -0.00048828125
          %v1107 = vmul.f32 %v1091, -0.00048828125
          %v1108 = vmul.f32 %v1092, -0.00048828125
          %v1109 = vmul.f32 %v1093, -0.00048828125
          %v1110 = vmul.f32 %v1094, -0.00048828125
          %v1111 = vmul.f32 %v1095, -0.00048828125
          %v1112 = vmul.f32 %v1096, 1.442695
          %v1113 = vpow.pop %v1112
          %v1114 = vmul.f32 %v1097, 1.442695
          %v1115 = vpow.pop %v1114
          %v1116 = vmul.f32 %v1098, 1.442695
          %v1117 = vpow.pop %v1116
          %v1118 = vmul.f32 %v1099, 1.442695
          %v1119 = vpow.pop %v1118
          %v1120 = vmul.f32 %v1100, 1.442695
          %v1121 = vpow.pop %v1120
          %v1122 = vmul.f32 %v1101, 1.442695
          %v1123 = vpow.pop %v1122
          %v1124 = vmul.f32 %v1102, 1.442695
          %v1125 = vpow.pop %v1124
          %v1126 = vmul.f32 %v1103, 1.442695
          %v1127 = vpow.pop %v1126
          %v1128 = vmul.f32 %v1104, 1.442695
          %v1129 = vpow.pop %v1128
          %v1130 = vmul.f32 %v1105, 1.442695
          %v1131 = vpow.pop %v1130
          %v1132 = vmul.f32 %v1106, 1.442695
          %v1133 = vpow.pop %v1132
          %v1134 = vmul.f32 %v1107, 1.442695
          %v1135 = vpow.pop %v1134
          %v1136 = vmul.f32 %v1108, 1.442695
          %v1137 = vpow.pop %v1136
          %v1138 = vmul.f32 %v1109, 1.442695
          %v1139 = vpow.pop %v1138
          %v1140 = vmul.f32 %v1110, 1.442695
          %v1141 = vpow.pop %v1140
          %v1142 = vmul.f32 %v1111, 1.442695
          %v1143 = vpow.pop %v1142
          %1144 = vst [vmem:[#allocation8] sm:$0xff] %v1113
          %1145 = vst [vmem:[#allocation8 + $0x8] sm:$0xff] %v1115
          %1146 = vst [vmem:[#allocation8 + $0x10] sm:$0xff] %v1117
          %1147 = vst [vmem:[#allocation8 + $0x18] sm:$0xff] %v1119
          %1148 = vst [vmem:[#allocation8 + $0x20] sm:$0xff] %v1121
          %1149 = vst [vmem:[#allocation8 + $0x28] sm:$0xff] %v1123
          %1150 = vst [vmem:[#allocation8 + $0x30] sm:$0xff] %v1125
          %1151 = vst [vmem:[#allocation8 + $0x38] sm:$0xff] %v1127
          %1152 = vst [vmem:[#allocation8 + $0x40] sm:$0xff] %v1129
          %1153 = vst [vmem:[#allocation8 + $0x48] sm:$0xff] %v1131
          %1154 = vst [vmem:[#allocation8 + $0x50] sm:$0xff] %v1133
          %1155 = vst [vmem:[#allocation8 + $0x58] sm:$0xff] %v1135
          %1156 = vst [vmem:[#allocation8 + $0x60] sm:$0xff] %v1137
          %1157 = vst [vmem:[#allocation8 + $0x68] sm:$0xff] %v1139
          %1158 = vst [vmem:[#allocation8 + $0x70] sm:$0xff] %v1141
          %1159 = vst [vmem:[#allocation8 + $0x78] sm:$0xff] %v1143
        $region44: #{tpu_custom_call.1} parent=27 // pred_fallthru
          _
        // Predicated region
        $region45: #{tpu_custom_call.1} parent=27 // pred_check
          %p1160 = pneg %p115
        $region46: #{tpu_custom_call.1} parent=27 // pred_check_branch
          %1162 = sbr.rel (%p1160) target = $region48
        $region47: #{tpu_custom_call.1} parent=27 // pred_region
          %s1163 = smul.u32 16, %s25
          %1165 = vsyncadd [#allocation5], 0
          %s1166 = sadd.s32 %s26, %s1163
          %s1167 = smul.addr %s1166, 8
          %s1168 = scalar_lea.hbm %s2, %s1167
          %s1169 = sshll.u32 [#allocation8], 4
          %s1170 = int_to_ptr.vmem [resolvable:$true] %s1169
          %s1171 = sshll.u32 %s1168, 4
          %s1172 = int_to_ptr.hbm [resolvable:$true] %s1171
          %1177 = dma.vmem_to_hbm [thread:$0]  %s1170, 2048, %s1172, [#allocation5], 128, 128, 8
        $region48: #{tpu_custom_call.1} parent=27 // pred_fallthru
          _
        // Predicated region
        $region49: #{tpu_custom_call.1} parent=27 // pred_check
          %p1178 = pneg %p115
        $region50: #{tpu_custom_call.1} parent=27 // pred_check_branch
          %1180 = sbr.rel (%p1178) target = $region52
        $region51: #{tpu_custom_call.1} parent=27 // pred_region
          %1182 = dma.done [#allocation5], 2048
        $region52: #{tpu_custom_call.1} parent=27 // pred_fallthru
          _
      $region28: #{tpu_custom_call.1} parent=5 // pred_fallthru
        _
      %p1183 = scmp.le.s32.totalorder 2, %s15
      // Predicated region
      $region53: #{tpu_custom_call.1} parent=5 // pred_check
        %p1184 = pneg %p1183
      $region54: #{tpu_custom_call.1} parent=5 // pred_check_branch
        %1186 = sbr.rel (%p1184) target = $region56
      $region55: #{tpu_custom_call.1} parent=5 // pred_region
        %s1187 = ssub.s32 %s15, 2
      $region56: #{tpu_custom_call.1} parent=5 // pred_fallthru
        _
    $region6: #{tpu_custom_call.1} parent=1 // loop_footer
      %s19 = sadd.s32 1, %s15
    $region7: #{tpu_custom_call.1} parent=1 // loop_footer_branch
      %14 = sbr.rel target = $region3
    $region8: #{tpu_custom_call.1} parent=1 // loop_exit
      _
    %1188 = vsyncpa [#allocation4], 1
    %s1189 = scalar_lea.sflag [#allocation4], 1
    %1190 = vsyncpa %s1189, 1
    %1191 = vsyncpa [#allocation7], 1
    %s1192 = scalar_lea.sflag [#allocation7], 1
    %1193 = vsyncpa %s1192, 1
    %1194 = vsyncpa [#allocation5], 1
    %s1195 = scalar_lea.sflag [#allocation5], 1
    %1196 = vsyncpa %s1195, 1

</llo_original>
